<compile_context>
chip_gen: v5e
topology: v5e:2x2
jax: 0.10.0
libtpu: 0.0.40
codegen_flags: <defaults>
</compile_context>

<pallas_src>
import functools

import jax
import jax.numpy as jnp
from jax.experimental import pallas as pl
from jax.experimental.pallas import tpu as pltpu


# --------------------------------------------------------------------------
# helpers
# --------------------------------------------------------------------------

def _round_up(x, m):
    return ((x + m - 1) // m) * m


def _seq_tiling(seq_len, bytes_per_row, sublane_align):
    """Pick (tile_rows, padded_seq_len) for streaming the encoder over S."""
    if seq_len <= 512:
        t = _round_up(seq_len, sublane_align)
        return t, t
    budget = 4 << 20                       # bytes per in-flight enc tile
    t = min(512, max(128, (budget // max(bytes_per_row, 1)) // 128 * 128))
    return t, _round_up(seq_len, t)


# --------------------------------------------------------------------------
# kernels
# --------------------------------------------------------------------------

def _dot_score_kernel(hid_ref, enc_ref, out_ref, acc_ref, *, seq_len, tile_s):
    """Scores + softmax for 'dot'/'general' (general pre-folded into hid).

    hid_ref : (B, H)       resident across the whole grid
    enc_ref : (tS, B, H)   seq-first tile (no wrapper transpose of enc)
    out_ref : (S_pad, B)   resident; written once at the last tile
    acc_ref : (S_pad, B)   VMEM scratch with raw scores
    """
    si = pl.program_id(0)
    enc = enc_ref[...]                                   # (tS, B, H)
    hid = hid_ref[...]                                   # (B, H)
    # H-contraction on VPU/XLU: this path is HBM-bound, the MXU would not
    # move the roofline, and this avoids any relayout of the seq-first block.
    s_tb = jnp.sum(enc * hid, axis=-1)                   # (tS, B)
    start = pl.multiple_of(si * tile_s, tile_s)
    acc_ref[pl.ds(start, tile_s), :] = s_tb

    @pl.when(si == pl.num_programs(0) - 1)
    def _finalize():
        scores = acc_ref[...]                            # (S_pad, B)
        row = jax.lax.broadcasted_iota(jnp.int32, scores.shape, 0)
        scores = jnp.where(row < seq_len, scores, -jnp.inf)
        m = jnp.max(scores, axis=0, keepdims=True)
        e = jnp.exp(scores - m)
        out_ref[...] = e / jnp.sum(e, axis=0, keepdims=True)


def _concat_score_kernel(hp_ref, enc_ref, w2t_ref, v_ref, out_ref, acc_ref,
                         *, seq_len, tile_s):
    """Scores + softmax for 'concat'.

    hp_ref  : (1, 1, H)      hidden @ W1.T + bias (folded in the wrapper)
    enc_ref : (tS, H)        encoder rows of one batch element
    w2t_ref : (H, H)         W2.T, resident
    v_ref   : (H, 1)         v as a column, resident
    out_ref : (1, S_pad, 1)  per-batch output block
    acc_ref : (S_pad, 1)     VMEM scratch with raw scores for this batch
    """
    si = pl.program_id(1)
    e = jnp.dot(enc_ref[...], w2t_ref[...],
                preferred_element_type=jnp.float32)      # (tS, H)  MXU
    energy = jnp.tanh(e + hp_ref[0])                     # (tS, H)
    s_col = jnp.dot(energy, v_ref[...],
                    preferred_element_type=jnp.float32)  # (tS, 1)  MXU
    start = pl.multiple_of(si * tile_s, tile_s)
    acc_ref[pl.ds(start, tile_s), :] = s_col

    @pl.when(si == pl.num_programs(1) - 1)
    def _finalize():
        scores = acc_ref[...]                            # (S_pad, 1)
        row = jax.lax.broadcasted_iota(jnp.int32, scores.shape, 0)
        scores = jnp.where(row < seq_len, scores, -jnp.inf)
        m = jnp.max(scores, axis=0, keepdims=True)
        e2 = jnp.exp(scores - m)
        probs = e2 / jnp.sum(e2, axis=0, keepdims=True)
        out_ref[...] = probs.reshape(out_ref.shape)


# --------------------------------------------------------------------------
# wrapper
# --------------------------------------------------------------------------

@functools.partial(jax.jit, static_argnums=0)
def attn_forward(method, hidden, encoder_outputs, params):
    """Equivalent of Attn(method, H).forward(hidden, encoder_outputs).

    hidden          : (1, B, H)
    encoder_outputs : (S, B, H)
    returns         : (B, 1, S) softmaxed attention weights
    """
    S, B, H = encoder_outputs.shape
    hid2d = hidden.reshape(B, H).astype(jnp.float32)
    enc = encoder_outputs.astype(jnp.float32)

    if method in ('dot', 'general'):
        if method == 'general':
            # hid . (enc @ W.T + b) == (hid @ W) . enc + hid.b ; the hid.b term
            # cancels under softmax, so fold W into the query once.
            hid_eff = jnp.dot(hid2d, params['attn_w'].astype(jnp.float32),
                              precision=jax.lax.Precision.HIGHEST)
        else:
            hid_eff = hid2d

        tile_s, s_pad = _seq_tiling(S, bytes_per_row=B * H * 4, sublane_align=1)
        if s_pad != S:
            # TODO(synk): feed a pre-padded encoder in production so this
            # extra XLA pad pass over enc disappears.
            enc = jnp.pad(enc, ((0, s_pad - S), (0, 0), (0, 0)))
        n_tiles = s_pad // tile_s

        kernel = functools.partial(_dot_score_kernel, seq_len=S, tile_s=tile_s)
        out_sb = pl.pallas_call(
            kernel,
            out_shape=jax.ShapeDtypeStruct((s_pad, B), jnp.float32),
            grid=(n_tiles,),
            in_specs=[
                pl.BlockSpec((B, H), lambda s: (0, 0)),             # resident
                pl.BlockSpec((tile_s, B, H), lambda s: (s, 0, 0)),
            ],
            out_specs=pl.BlockSpec((s_pad, B), lambda s: (0, 0)),   # resident
            scratch_shapes=[pltpu.VMEM((s_pad, B), jnp.float32)],
            compiler_params=pltpu.CompilerParams(
                dimension_semantics=("arbitrary",)),
            cost_estimate=pl.CostEstimate(
                flops=2 * s_pad * B * H,
                transcendentals=s_pad * B,
                bytes_accessed=4 * (s_pad * B * H + B * H + s_pad * B)),
        )(hid_eff, enc)
        probs = out_sb[:S, :].T                                     # (B, S)

    elif method == 'concat':
        w = params['attn_w'].astype(jnp.float32)                    # (H, 2H)
        w1 = w[:, :H]
        w2t = w[:, H:].T                                            # (H, H)
        bias = params['attn_b'].astype(jnp.float32)
        v_col = params['v'].astype(jnp.float32).reshape(H, 1)

        # cat([hid, enc]) @ W.T + b == hid @ W1.T + enc @ W2.T + b.
        # The hidden part is S-independent: fold it (and the bias) into a
        # per-batch row outside the kernel.
        hid_proj = (jnp.einsum('bh,kh->bk', hid2d, w1,
                               precision=jax.lax.Precision.HIGHEST)
                    + bias).reshape(B, 1, H)

        tile_s, s_pad = _seq_tiling(S, bytes_per_row=H * 4, sublane_align=8)
        tiles_per_b = s_pad // tile_s

        # (S, B, H) -> (B*S_pad, H): lane-dim-H rows so the per-position HxH
        # product is a clean 2-D MXU matmul inside the kernel.
        enc_b = jnp.transpose(enc, (1, 0, 2))
        if s_pad != S:
            enc_b = jnp.pad(enc_b, ((0, 0), (0, s_pad - S), (0, 0)))
        enc2d = enc_b.reshape(B * s_pad, H)

        kernel = functools.partial(_concat_score_kernel,
                                   seq_len=S, tile_s=tile_s)
        out_bs1 = pl.pallas_call(
            kernel,
            out_shape=jax.ShapeDtypeStruct((B, s_pad, 1), jnp.float32),
            grid=(B, tiles_per_b),
            in_specs=[
                pl.BlockSpec((1, 1, H), lambda b, s: (b, 0, 0)),
                pl.BlockSpec((tile_s, H),
                             lambda b, s: (b * tiles_per_b + s, 0)),
                pl.BlockSpec((H, H), lambda b, s: (0, 0)),          # resident
                pl.BlockSpec((H, 1), lambda b, s: (0, 0)),          # resident
            ],
            out_specs=pl.BlockSpec((1, s_pad, 1), lambda b, s: (b, 0, 0)),
            scratch_shapes=[pltpu.VMEM((s_pad, 1), jnp.float32)],
            compiler_params=pltpu.CompilerParams(
                dimension_semantics=("parallel", "arbitrary")),
            cost_estimate=pl.CostEstimate(
                flops=2 * B * s_pad * H * (H + 1),
                transcendentals=B * s_pad * (H + 1),
                bytes_accessed=4 * (B * s_pad * H + H * H + B * H + H
                                    + B * s_pad)),
        )(hid_proj, enc2d, w2t, v_col)
        probs = out_bs1[:, :S, 0]                                   # (B, S)

    else:
        raise ValueError(method, 'is not an appropriate attention method.')

    return probs[:, None, :]                                        # (B, 1, S)


# -------------------------- pure-JAX reference -----------------------------

def attn_ref(method, hidden, encoder_outputs, params):
    if method == 'dot':
        scores = jnp.sum(hidden * encoder_outputs, axis=2)               # (S, B)
    elif method == 'general':
        energy = jnp.einsum('sbh,kh->sbk', encoder_outputs, params['attn_w'],
                            precision=jax.lax.Precision.HIGHEST) + params['attn_b']
        scores = jnp.sum(hidden * energy, axis=2)
    else:  # concat
        hid_exp = jnp.broadcast_to(hidden, encoder_outputs.shape)
        cat = jnp.concatenate([hid_exp, encoder_outputs], axis=2)
        energy = jnp.tanh(jnp.einsum('sbc,kc->sbk', cat, params['attn_w'],
                                     precision=jax.lax.Precision.HIGHEST)
                          + params['attn_b'])
        scores = jnp.sum(params['v'] * energy, axis=2)
    scores = scores.T                                                     # (B, S)
    return jax.nn.softmax(scores, axis=1)[:, None, :]                     # (B, 1, S)


# ----------------------------------- main -----------------------------------

if __name__ == "__main__":
    B, S, H = 2, 8, 32   # small shapes consistent with the module's forward

    key = jax.random.PRNGKey(0)
    k_hid, k_enc, kw1, kb1, kw2, kb2, kv = jax.random.split(key, 7)

    hidden = jax.random.normal(k_hid, (1, B, H), dtype=jnp.float32)
    encoder_outputs = jax.random.normal(k_enc, (S, B, H), dtype=jnp.float32)

    params_by_method = {
        'dot': {},
        'general': {
            'attn_w': 0.1 * jax.random.normal(kw1, (H, H), dtype=jnp.float32),
            'attn_b': 0.1 * jax.random.normal(kb1, (H,), dtype=jnp.float32),
        },
        'concat': {
            'attn_w': 0.1 * jax.random.normal(kw2, (H, 2 * H), dtype=jnp.float32),
            'attn_b': 0.1 * jax.random.normal(kb2, (H,), dtype=jnp.float32),
            'v': jax.random.normal(kv, (H,), dtype=jnp.float32),
        },
    }

    for method in ['dot', 'general', 'concat']:
        params = params_by_method[method]
        out = attn_forward(method, hidden, encoder_outputs, params)
        out = jax.block_until_ready(out)
        ref = attn_ref(method, hidden, encoder_outputs, params)
        assert out.shape == (B, 1, S), (method, out.shape)
        assert jnp.allclose(out, ref, rtol=1e-5, atol=1e-5), (
            f"mismatch for method={method}")

    print("KERNEL_OK")
</pallas_src>

<mosaic_0001>
module attributes {stable_mosaic.version = 11 : i64} {
  func.func @_dot_score_kernel(%arg0: i32, %arg1: memref<2x32xf32, #tpu.memory_space<vmem>>, %arg2: memref<8x2x32xf32, #tpu.memory_space<vmem>>, %arg3: memref<8x2xf32, #tpu.memory_space<vmem>>, %arg4: memref<8x2xf32, #tpu.memory_space<vmem>>) attributes {dimension_semantics = [#tpu.dimension_semantics<arbitrary>], iteration_bounds = array<i64: 1>, scalar_prefetch = 0 : i64, scratch_operands = 1 : i64, tpu.core_type = #tpu.core_type<tc>, window_params = [{pipeline_mode = #tpu.pipeline_mode<synchronous>, transform_indices = @transform_0, window_bounds = array<i64: 2, 32>}, {transform_indices = @transform_1, window_bounds = array<i64: 8, 2, 32>}, {pipeline_mode = #tpu.pipeline_mode<synchronous>, transform_indices = @transform_2, window_bounds = array<i64: 8, 2>}]} {
    %c0 = arith.constant 0 : index
    %c0_0 = arith.constant 0 : index
    %c0_1 = arith.constant 0 : index
    %0 = vector.load %arg2[%c0, %c0_0, %c0_1] : memref<8x2x32xf32, #tpu.memory_space<vmem>>, vector<8x2x32xf32>
    %c0_2 = arith.constant 0 : index
    %c0_3 = arith.constant 0 : index
    %1 = vector.load %arg1[%c0_2, %c0_3] : memref<2x32xf32, #tpu.memory_space<vmem>>, vector<2x32xf32>
    %2 = vector.shape_cast %1 : vector<2x32xf32> to vector<1x2x32xf32>
    %3 = vector.broadcast %2 : vector<1x2x32xf32> to vector<8x2x32xf32>
    %4 = arith.mulf %0, %3 : vector<8x2x32xf32>
    %cst = arith.constant dense<0.000000e+00> : vector<8x2xf32>
    %5 = vector.multi_reduction <add>, %4, %cst [2] : vector<8x2x32xf32> to vector<8x2xf32>
    %c8_i32 = arith.constant 8 : i32
    %6 = arith.muli %arg0, %c8_i32 : i32
    %7 = tpu.assume_multiple %6, 8 : i32
    %8 = arith.index_cast %7 : i32 to index
    %c0_4 = arith.constant 0 : index
    %9 = vector.load %arg4[%8, %c0_4] : memref<8x2xf32, #tpu.memory_space<vmem>>, vector<8x2xf32>
    tpu.vector_store %arg4[%8, %c0_4], %5 {strides = array<i32>} : memref<8x2xf32, #tpu.memory_space<vmem>>, vector<8x2xf32>,
    %c0_i32 = arith.constant 0 : i32
    %10 = arith.cmpi eq, %arg0, %c0_i32 : i32
    %11 = arith.extui %10 : i1 to i32
    %c0_i32_5 = arith.constant 0 : i32
    %12 = arith.cmpi ne, %11, %c0_i32_5 : i32
    scf.if %12 {
      %c0_6 = arith.constant 0 : index
      %c0_7 = arith.constant 0 : index
      %13 = vector.load %arg4[%c0_6, %c0_7] : memref<8x2xf32, #tpu.memory_space<vmem>>, vector<8x2xf32>
      %14 = tpu.iota {dimensions = array<i32: 0>} : vector<8x2xi32>
      %c8_i32_8 = arith.constant 8 : i32
      %15 = vector.broadcast %c8_i32_8 : i32 to vector<8x2xi32>
      %16 = arith.cmpi slt, %14, %15 : vector<8x2xi32>
      %cst_9 = arith.constant 0xFF800000 : f32
      %17 = vector.broadcast %cst_9 : f32 to vector<8x2xf32>
      %18 = arith.select %16, %13, %17 : vector<8x2xi1>, vector<8x2xf32>
      %cst_10 = arith.constant dense<0xFF800000> : vector<2xf32>
      %19 = vector.multi_reduction <maximumf>, %18, %cst_10 [0] : vector<8x2xf32> to vector<2xf32>
      %20 = vector.shape_cast %19 : vector<2xf32> to vector<1x2xf32>
      %21 = vector.broadcast %20 : vector<1x2xf32> to vector<8x2xf32>
      %22 = arith.subf %18, %21 : vector<8x2xf32>
      %23 = math.exp %22 : vector<8x2xf32>
      %cst_11 = arith.constant dense<0.000000e+00> : vector<2xf32>
      %24 = vector.multi_reduction <add>, %23, %cst_11 [0] : vector<8x2xf32> to vector<2xf32>
      %25 = vector.shape_cast %24 : vector<2xf32> to vector<1x2xf32>
      %26 = vector.broadcast %25 : vector<1x2xf32> to vector<8x2xf32>
      %27 = arith.divf %23, %26 : vector<8x2xf32>
      %c0_12 = arith.constant 0 : index
      %c0_13 = arith.constant 0 : index
      %28 = vector.load %arg3[%c0_12, %c0_13] : memref<8x2xf32, #tpu.memory_space<vmem>>, vector<8x2xf32>
      tpu.vector_store %arg3[%c0_12, %c0_13], %27 {strides = array<i32>} : memref<8x2xf32, #tpu.memory_space<vmem>>, vector<8x2xf32>,
    } else {
    }
    return
  }
  func.func @transform_0(%arg0: i32) -> (i32, i32) {
    %c0_i32 = arith.constant 0 : i32
    %c0_i32_0 = arith.constant 0 : i32
    %c0_i32_1 = arith.constant 0 : i32
    return %c0_i32, %c0_i32_0 : i32, i32
  }
  func.func @transform_1(%arg0: i32) -> (i32, i32, i32) {
    %c0_i32 = arith.constant 0 : i32
    %c0_i32_0 = arith.constant 0 : i32
    %c0_i32_1 = arith.constant 0 : i32
    return %arg0, %c0_i32, %c0_i32_0 : i32, i32, i32
  }
  func.func @transform_2(%arg0: i32) -> (i32, i32) {
    %c0_i32 = arith.constant 0 : i32
    %c0_i32_0 = arith.constant 0 : i32
    %c0_i32_1 = arith.constant 0 : i32
    return %c0_i32, %c0_i32_0 : i32, i32
  }
}

</mosaic_0001>

<llo_original>
// kernel: attn_forward.1
$region0: #{attn_forward.1}
  #allocation0 [shape = 'u32[]', space=smem, size = 0x4, offset = 0x4, fixed_abs, tag = 'smem constant byte address 0x4 - core index']
  #allocation1 [shape = 'u32[72,128]{1,0:T(1,128)}', space=vmem, size = 0x9000, scoped, tag = 'internal scratch']
  #allocation2 [shape = 'f32[8,2]{1,0:T(8,128)}', space=vmem, size = 0x1000, scoped, tag = 'scratch operand']
  %s0 = inlined_call_operand.hbm [shape: f32[2,32], index: 0, kind: input, shape index: {}]
  %s1 = inlined_call_operand.hbm [shape: f32[8,2,32], index: 1, kind: input, shape index: {}]
  %s2 = inlined_call_operand.vmem [shape: f32[8,2], index: 2, kind: output, shape index: {}]
  %s3 = sld [smem:[#allocation0]]
  $region30: #{attn_forward.1} parent=0
    _
  %s5 = ssub.s32 1, %s3
  %s6 = scalar_select 0, %s5, %s3
  $region1: #{attn_forward.1} parent=0
    #allocation3 [shape = 'u8[1024]{0}', space=vmem, size = 0x400, scoped, tag = 'input window, operand 0, single buffered']
    #allocation4 [shape = 's32[1]{0}', space=sflag, size = 0x4, scoped, tag = 'scoped memory for attn_forward.1']
    #allocation5 [shape = 'u8[8192]{0}', space=vmem, size = 0x2000, scoped, tag = 'input window, operand 1, single buffered']
    #allocation6 [shape = 's32[1]{0}', space=sflag, size = 0x4, scoped, tag = 'scoped memory for attn_forward.1']
    %7 = vsyncpa [#allocation4], 0
    %8 = vsyncpa [#allocation6], 0
    // Predicated region
    $region2: #{attn_forward.1} parent=1 // pred_check
      _
    $region3: #{attn_forward.1} parent=1 // pred_check_branch
      %10 = sbr.rel (0) target = $region5
    $region4: #{attn_forward.1} parent=1 // pred_region
      %12 = vsyncadd [#allocation4], 0
      %s14 = sshll.u32 %s0, 4
      %s15 = int_to_ptr.hbm [resolvable:$true] %s14
      %s16 = sshll.u32 [#allocation3], 4
      %s17 = int_to_ptr.vmem [resolvable:$true] %s16
      %19 = dma.hbm_to_vmem [thread:$0]  %s15, 32, %s17, [#allocation4]
    $region5: #{attn_forward.1} parent=1 // pred_fallthru
      _
    // Predicated region
    $region6: #{attn_forward.1} parent=1 // pred_check
      _
    $region7: #{attn_forward.1} parent=1 // pred_check_branch
      %21 = sbr.rel (0) target = $region9
    $region8: #{attn_forward.1} parent=1 // pred_region
      %23 = vsyncadd [#allocation6], 0
      %s24 = sshll.u32 %s1, 4
      %s25 = int_to_ptr.hbm [resolvable:$true] %s24
      %s26 = sshll.u32 [#allocation5], 4
      %s27 = int_to_ptr.vmem [resolvable:$true] %s26
      %32 = dma.hbm_to_vmem [thread:$0]  %s25, 256, %s27, [#allocation6], 32, 32, 2
    $region9: #{attn_forward.1} parent=1 // pred_fallthru
      _
    // Predicated region
    $region10: #{attn_forward.1} parent=1 // pred_check
      _
    $region11: #{attn_forward.1} parent=1 // pred_check_branch
      %34 = sbr.rel (0) target = $region13
    $region12: #{attn_forward.1} parent=1 // pred_region
      %36 = dma.done [#allocation4], 32
    $region13: #{attn_forward.1} parent=1 // pred_fallthru
      _
    // Predicated region
    $region14: #{attn_forward.1} parent=1 // pred_check
      _
    $region15: #{attn_forward.1} parent=1 // pred_check_branch
      %38 = sbr.rel (0) target = $region17
    $region16: #{attn_forward.1} parent=1 // pred_region
      %40 = dma.done [#allocation6], 256
    $region17: #{attn_forward.1} parent=1 // pred_fallthru
      _
    %v41 = vld [vmem:[#allocation5] sm:$0x3]
    %v42 = vld [vmem:[#allocation5 + $0x2] sm:$0x3]
    %v43 = vld [vmem:[#allocation5 + $0x4] sm:$0x3]
    %v44 = vld [vmem:[#allocation5 + $0x6] sm:$0x3]
    %v45 = vld [vmem:[#allocation5 + $0x8] sm:$0x3]
    %v46 = vld [vmem:[#allocation5 + $0xa] sm:$0x3]
    %v47 = vld [vmem:[#allocation5 + $0xc] sm:$0x3]
    %v48 = vld [vmem:[#allocation5 + $0xe] sm:$0x3]
    %v49 = vld [vmem:[#allocation3] sm:$0x3]
    %v50 = vmul.f32 %v41, %v49
    %v51 = vmul.f32 %v42, %v49
    %v52 = vmul.f32 %v43, %v49
    %v53 = vmul.f32 %v44, %v49
    %v54 = vmul.f32 %v45, %v49
    %v55 = vmul.f32 %v46, %v49
    %v56 = vmul.f32 %v47, %v49
    %v57 = vmul.f32 %v48, %v49
    %vm58 = vcmask 254976
    %v59 = vsel %vm58, %v50, 0.0
    %60 = vadd.xlane.f32.xlu0 %v59
    %v61 = vpop.xlane.xlu0 %60
    %v62 = vsel %vm58, %v51, 0.0
    %63 = vadd.xlane.f32.xlu0 %v62
    %v64 = vpop.xlane.xlu0 %63
    %v65 = vsel %vm58, %v52, 0.0
    %66 = vadd.xlane.f32.xlu0 %v65
    %v67 = vpop.xlane.xlu0 %66
    %v68 = vsel %vm58, %v53, 0.0
    %69 = vadd.xlane.f32.xlu0 %v68
    %v70 = vpop.xlane.xlu0 %69
    %v71 = vsel %vm58, %v54, 0.0
    %72 = vadd.xlane.f32.xlu0 %v71
    %v73 = vpop.xlane.xlu0 %72
    %v74 = vsel %vm58, %v55, 0.0
    %75 = vadd.xlane.f32.xlu0 %v74
    %v76 = vpop.xlane.xlu0 %75
    %v77 = vsel %vm58, %v56, 0.0
    %78 = vadd.xlane.f32.xlu0 %v77
    %v79 = vpop.xlane.xlu0 %78
    %v80 = vsel %vm58, %v57, 0.0
    %81 = vadd.xlane.f32.xlu0 %v80
    %v82 = vpop.xlane.xlu0 %81
    %s83 = smul.u32 0, 8
    %v92 = vlaneseq
    %v93 = vand.u32 %v92, 127
    %v94 = vperm.slane %v61, %v93
    %v95 = vperm.slane %v64, %v93
    %v96 = vperm.slane %v67, %v93
    %v97 = vperm.slane %v70, %v93
    %v98 = vperm.slane %v73, %v93
    %v99 = vperm.slane %v76, %v93
    %v100 = vperm.slane %v79, %v93
    %v101 = vperm.slane %v82, %v93
    %vm102 = vcmask 1041409
    %v103 = vsel %vm102, %v95, %v94
    %vm104 = vcmask 1042434
    %v105 = vsel %vm104, %v96, %v103
    %vm106 = vcmask 1043459
    %v107 = vsel %vm106, %v97, %v105
    %vm108 = vcmask 1044484
    %v109 = vsel %vm108, %v98, %v107
    %vm110 = vcmask 1045509
    %v111 = vsel %vm110, %v99, %v109
    %vm112 = vcmask 1046534
    %v113 = vsel %vm112, %v100, %v111
    %vm114 = vcmask 1047559
    %v115 = vsel %vm114, %v101, %v113
    %s117 = scalar_lea.vmem [#allocation2], %s83
    %vm118 = vcmask 15360
    %119 = vst.msk [vmem:[%s117] sm:$0xff] %vm118, %v115
    %p120 = scmp.eq.s32.totalorder 0, 0
    // Predicated region
    $region18: #{attn_forward.1} parent=1 // pred_check
      %p121 = pneg %p120
    $region19: #{attn_forward.1} parent=1 // pred_check_branch
      %123 = sbr.rel (%p121) target = $region21
    $region20: #{attn_forward.1} parent=1 // pred_region
      %v124 = vld [vmem:[#allocation2] sm:$0xff]
      %v125 = vlaneseq
      %v126 = vshrl.u32 %v125, 7
      %vm127 = vcmp.lt.s32.totalorder %v126, 8
      %v128 = vsel %vm127, %v124, -inf
      %v129 = vsel %vm118, %v128, -inf
      %v130 = vrot.slane %v129, 4
      %v131 = vmax.f32 %v129, %v130
      %v132 = vrot.slane %v131, 2
      %v133 = vmax.f32 %v131, %v132
      %v134 = vrot.slane %v133, 1
      %v135 = vmax.f32 %v133, %v134
      %v136 = vsub.f32 %v128, %v135
      %v137 = vmul.f32 %v136, 1.442695
      %v138 = vpow.pop %v137
      %v139 = vsel %vm118, %v138, 0.0
      %v140 = vrot.slane %v139, 4
      %v141 = vadd.f32 %v139, %v140
      %v142 = vrot.slane %v141, 2
      %v143 = vadd.f32 %v141, %v142
      %v144 = vrot.slane %v143, 1
      %v145 = vadd.f32 %v143, %v144
      %v146 = vrcp.pop %v145
      %v147 = vmul.f32 %v145, %v146
      %v148 = vsub.f32 1.0, %v147
      %v149 = vmul.f32 %v146, %v148
      %v150 = vadd.f32 %v146, %v149
      %vm151 = vweird.f32 %v145
      %vm152 = vweird.f32 %v146
      %vm153 = vmor %vm151, %vm152
      %v154 = vsel %vm153, %v146, %v150
      %v155 = vand.u32 2147483647, %v145
      %vm156 = vcmp.eq.f32.partialorder %v155, 8.507059e+37
      %v157 = vand.u32 %v145, 2147483648
      %v158 = vor.u32 1.1754944e-38, %v157
      %v159 = vsel %vm156, %v158, %v154
      %v160 = vmul.f32 %v138, %v159
      %161 = vst.msk [vmem:[%s2] sm:$0xff] %vm118, %v160
    $region21: #{attn_forward.1} parent=1 // pred_fallthru
      _
    // Predicated region
    $region22: #{attn_forward.1} parent=1 // pred_check
      _
    $region23: #{attn_forward.1} parent=1 // pred_check_branch
      %163 = sbr.rel (0) target = $region25
    $region24: #{attn_forward.1} parent=1 // pred_region
      _
    $region25: #{attn_forward.1} parent=1 // pred_fallthru
      _
    // Predicated region
    $region26: #{attn_forward.1} parent=1 // pred_check
      _
    $region27: #{attn_forward.1} parent=1 // pred_check_branch
      %165 = sbr.rel (0) target = $region29
    $region28: #{attn_forward.1} parent=1 // pred_region
      _
    $region29: #{attn_forward.1} parent=1 // pred_fallthru
      _
    %166 = vsyncpa [#allocation4], 1
    %167 = vsyncpa [#allocation6], 1

</llo_original>
